<compile_context>
chip_gen: v6e
topology: v6e:2x2x1
jax: 0.10.0
libtpu: 0.0.40
codegen_flags: <defaults>
</compile_context>

<pallas_src>
import jax
import jax.numpy as jnp
from jax.experimental import pallas as pl
from jax.experimental.pallas import tpu as pltpu

# Small shapes consistent with the module.
B, T, D, H = 2, 8, 16, 32          # batch, seq len, input dim, hidden (num_directions=1)
TWO_B = 2 * B                      # contexts and responses stacked along batch


# ----------------------------- fused kernel ----------------------------------

def dual_encoder_kernel(x_ref, wih_ref, whh_ref, b_ref, m_ref,
                        scores_ref, resp_ref):
    """Encode stacked (contexts ++ responses), then bilinear sigmoid scores.

    x_ref      : (T, 2B, D)  time-major stacked inputs (rows 0..B-1 = contexts,
                              rows B..2B-1 = responses at each timestep)
    wih/whh/b  : RNN parameters (D,H), (H,H), (1,H)
    m_ref      : (H, H) bilinear matrix M
    scores_ref : (1, B)  sigmoid(c_i^T M r_i)   (lane-dense row)
    resp_ref   : (B, H)  last-step response hidden states
    """
    wih = wih_ref[...]                       # (D, H)
    whh = whh_ref[...]                       # (H, H)
    b = b_ref[...]                           # (1, H)
    m = m_ref[...]                           # (H, H)
    x = x_ref[...]                           # (T, 2B, D)

    # Hoist the input projection out of the recurrence: one matmul + one bias add.
    xw = jnp.dot(x.reshape(T * TWO_B, D), wih,
                 preferred_element_type=jnp.float32) + b        # (T*2B, H)

    # Serial tanh recurrence (T is small & static -> fully unrolled).
    h = jnp.zeros((TWO_B, H), jnp.float32)
    for t in range(T):
        h = jnp.tanh(xw[t * TWO_B:(t + 1) * TWO_B, :]
                     + jnp.dot(h, whh, preferred_element_type=jnp.float32))

    c = h[:B, :]                             # context last-step hidden  (B, H)
    r = h[B:, :]                             # response last-step hidden (B, H)

    # results = sigmoid(diag(C @ M @ R^T)) == sigmoid(sum((C @ M) * R, axis=-1))
    cm = jnp.dot(c, m, preferred_element_type=jnp.float32)      # (B, H)
    s = jnp.sum(cm * r, axis=-1)                                # (B,)
    scores_ref[...] = jax.nn.sigmoid(s).reshape(1, B)
    resp_ref[...] = r


# ----------------------------- wrapper ----------------------------------------

_FLOPS = (2 * TWO_B * T * D * H          # input projection
          + 2 * TWO_B * T * H * H        # recurrence matmuls
          + 2 * B * H * H                # C @ M
          + 2 * B * H)                   # elementwise score reduction
_TRANSCENDENTALS = TWO_B * T * H + B     # tanh + sigmoid
_BYTES = 4 * (TWO_B * T * D + D * H + H * H + H + H * H + B + B * H)

_vmem_spec = pl.BlockSpec(memory_space=pltpu.MemorySpace.VMEM)

_fused_call = pl.pallas_call(
    dual_encoder_kernel,
    out_shape=(jax.ShapeDtypeStruct((1, B), jnp.float32),   # scores (lane-dense)
               jax.ShapeDtypeStruct((B, H), jnp.float32)),  # response encodings
    in_specs=[_vmem_spec] * 5,
    out_specs=(_vmem_spec, _vmem_spec),
    cost_estimate=pl.CostEstimate(flops=_FLOPS,
                                  transcendentals=_TRANSCENDENTALS,
                                  bytes_accessed=_BYTES),
)


@jax.jit
def dual_encoder_forward(contexts, responses, params):
    """Mirrors DualEncoder.forward: returns (results, response_encodings)."""
    w_ih, w_hh, b_h, M = params
    # Stack the two encoder calls into one batch and go time-major so each
    # recurrence step reads a contiguous row block inside the kernel.
    x_all = jnp.concatenate([contexts, responses], axis=0)      # (2B, T, D)
    x_tm = jnp.transpose(x_all, (1, 0, 2))                      # (T, 2B, D)
    scores, resp_last = _fused_call(x_tm, w_ih, w_hh, b_h, M)
    results = scores.reshape(B)                                 # (B,)
    # torch returns a python list of (h_size, 1) tensors; we return the stacked
    # (B, H, 1) array built with a single reshape (row i == encoding i).
    response_encodings = resp_last.reshape(B, H, 1)
    return results, response_encodings


# ----------------------------- reference (plain JAX) --------------------------

def reference_forward(contexts, responses, params):
    w_ih, w_hh, b_h, M = params

    def enc(x):
        h = jnp.zeros((B, H), jnp.float32)
        for t in range(T):
            h = jnp.tanh(x[:, t, :] @ w_ih + h @ w_hh + b_h)
        return h

    c = enc(contexts)
    r = enc(responses)
    return jax.nn.sigmoid(jnp.sum((c @ M) * r, axis=-1)), r


# ----------------------------- main --------------------------------------------

if __name__ == "__main__":
    key = jax.random.PRNGKey(0)
    k_c, k_r, k_ih, k_hh, k_b, k_m = jax.random.split(key, 6)

    contexts = jax.random.normal(k_c, (B, T, D), jnp.float32)
    responses = jax.random.normal(k_r, (B, T, D), jnp.float32)

    # Deterministic parameter init (M ~ normal, matching init.normal_).
    # TODO(synk): PyTorch nn.RNN carries two biases (b_ih + b_hh); the synthesized
    # encoder uses a single fused bias, so it is not bit-matching a torch checkpoint.
    w_ih = 0.1 * jax.random.normal(k_ih, (D, H), jnp.float32)
    w_hh = 0.1 * jax.random.normal(k_hh, (H, H), jnp.float32)
    b_h = 0.1 * jax.random.normal(k_b, (1, H), jnp.float32)
    M = jax.random.normal(k_m, (H, H), jnp.float32)
    params = (w_ih, w_hh, b_h, M)

    results, response_encodings = dual_encoder_forward(contexts, responses, params)
    results = jax.block_until_ready(results)
    response_encodings = jax.block_until_ready(response_encodings)

    ref_scores, ref_resp = reference_forward(contexts, responses, params)

    assert results.shape == (B,)
    assert response_encodings.shape == (B, H, 1)
    assert response_encodings[0].shape == (H, 1)
    assert jnp.allclose(results, ref_scores, atol=1e-5, rtol=1e-5)
    assert jnp.allclose(response_encodings.reshape(B, H), ref_resp, atol=1e-5, rtol=1e-5)

    print("KERNEL_OK")
</pallas_src>

<mosaic_0001>
module attributes {stable_mosaic.version = 11 : i64} {
  func.func @dual_encoder_kernel(%arg0: memref<8x4x16xf32, #tpu.memory_space<vmem>>, %arg1: memref<16x32xf32, #tpu.memory_space<vmem>>, %arg2: memref<32x32xf32, #tpu.memory_space<vmem>>, %arg3: memref<1x32xf32, #tpu.memory_space<vmem>>, %arg4: memref<32x32xf32, #tpu.memory_space<vmem>>, %arg5: memref<1x2xf32, #tpu.memory_space<vmem>>, %arg6: memref<2x32xf32, #tpu.memory_space<vmem>>) attributes {dimension_semantics = [], scalar_prefetch = 0 : i64, scratch_operands = 0 : i64, tpu.core_type = #tpu.core_type<tc>} {
    %c0 = arith.constant 0 : index
    %c0_0 = arith.constant 0 : index
    %0 = vector.load %arg1[%c0, %c0_0] : memref<16x32xf32, #tpu.memory_space<vmem>>, vector<16x32xf32>
    %c0_1 = arith.constant 0 : index
    %c0_2 = arith.constant 0 : index
    %1 = vector.load %arg2[%c0_1, %c0_2] : memref<32x32xf32, #tpu.memory_space<vmem>>, vector<32x32xf32>
    %c0_3 = arith.constant 0 : index
    %c0_4 = arith.constant 0 : index
    %2 = vector.load %arg3[%c0_3, %c0_4] : memref<1x32xf32, #tpu.memory_space<vmem>>, vector<1x32xf32>
    %c0_5 = arith.constant 0 : index
    %c0_6 = arith.constant 0 : index
    %3 = vector.load %arg4[%c0_5, %c0_6] : memref<32x32xf32, #tpu.memory_space<vmem>>, vector<32x32xf32>
    %c0_7 = arith.constant 0 : index
    %c0_8 = arith.constant 0 : index
    %c0_9 = arith.constant 0 : index
    %4 = vector.load %arg0[%c0_7, %c0_8, %c0_9] : memref<8x4x16xf32, #tpu.memory_space<vmem>>, vector<8x4x16xf32>
    %5 = vector.shape_cast %4 : vector<8x4x16xf32> to vector<32x16xf32>
    %cst = arith.constant dense<0.000000e+00> : vector<32x32xf32>
    %6 = tpu.matmul %5, %0, %cst {dimension_numbers = #tpu.dot_dimension_numbers<[1], [0], [0], [1], [0, 0, 1, 1], [], []>} : vector<32x16xf32>, vector<16x32xf32>, vector<32x32xf32> -> vector<32x32xf32>
    %7 = vector.broadcast %2 : vector<1x32xf32> to vector<32x32xf32>
    %8 = arith.addf %6, %7 : vector<32x32xf32>
    %cst_10 = arith.constant 0.000000e+00 : f32
    %9 = vector.broadcast %cst_10 : f32 to vector<4x32xf32>
    %10 = vector.extract_strided_slice %8 {offsets = [0, 0], sizes = [4, 32], strides = [1, 1]} : vector<32x32xf32> to vector<4x32xf32>
    %cst_11 = arith.constant dense<0.000000e+00> : vector<4x32xf32>
    %11 = tpu.matmul %9, %1, %cst_11 {dimension_numbers = #tpu.dot_dimension_numbers<[1], [0], [0], [1], [0, 0, 1, 1], [], []>} : vector<4x32xf32>, vector<32x32xf32>, vector<4x32xf32> -> vector<4x32xf32>
    %12 = arith.addf %10, %11 : vector<4x32xf32>
    %13 = math.tanh %12 : vector<4x32xf32>
    %14 = vector.extract_strided_slice %8 {offsets = [4, 0], sizes = [4, 32], strides = [1, 1]} : vector<32x32xf32> to vector<4x32xf32>
    %cst_12 = arith.constant dense<0.000000e+00> : vector<4x32xf32>
    %15 = tpu.matmul %13, %1, %cst_12 {dimension_numbers = #tpu.dot_dimension_numbers<[1], [0], [0], [1], [0, 0, 1, 1], [], []>} : vector<4x32xf32>, vector<32x32xf32>, vector<4x32xf32> -> vector<4x32xf32>
    %16 = arith.addf %14, %15 : vector<4x32xf32>
    %17 = math.tanh %16 : vector<4x32xf32>
    %18 = vector.extract_strided_slice %8 {offsets = [8, 0], sizes = [4, 32], strides = [1, 1]} : vector<32x32xf32> to vector<4x32xf32>
    %cst_13 = arith.constant dense<0.000000e+00> : vector<4x32xf32>
    %19 = tpu.matmul %17, %1, %cst_13 {dimension_numbers = #tpu.dot_dimension_numbers<[1], [0], [0], [1], [0, 0, 1, 1], [], []>} : vector<4x32xf32>, vector<32x32xf32>, vector<4x32xf32> -> vector<4x32xf32>
    %20 = arith.addf %18, %19 : vector<4x32xf32>
    %21 = math.tanh %20 : vector<4x32xf32>
    %22 = vector.extract_strided_slice %8 {offsets = [12, 0], sizes = [4, 32], strides = [1, 1]} : vector<32x32xf32> to vector<4x32xf32>
    %cst_14 = arith.constant dense<0.000000e+00> : vector<4x32xf32>
    %23 = tpu.matmul %21, %1, %cst_14 {dimension_numbers = #tpu.dot_dimension_numbers<[1], [0], [0], [1], [0, 0, 1, 1], [], []>} : vector<4x32xf32>, vector<32x32xf32>, vector<4x32xf32> -> vector<4x32xf32>
    %24 = arith.addf %22, %23 : vector<4x32xf32>
    %25 = math.tanh %24 : vector<4x32xf32>
    %26 = vector.extract_strided_slice %8 {offsets = [16, 0], sizes = [4, 32], strides = [1, 1]} : vector<32x32xf32> to vector<4x32xf32>
    %cst_15 = arith.constant dense<0.000000e+00> : vector<4x32xf32>
    %27 = tpu.matmul %25, %1, %cst_15 {dimension_numbers = #tpu.dot_dimension_numbers<[1], [0], [0], [1], [0, 0, 1, 1], [], []>} : vector<4x32xf32>, vector<32x32xf32>, vector<4x32xf32> -> vector<4x32xf32>
    %28 = arith.addf %26, %27 : vector<4x32xf32>
    %29 = math.tanh %28 : vector<4x32xf32>
    %30 = vector.extract_strided_slice %8 {offsets = [20, 0], sizes = [4, 32], strides = [1, 1]} : vector<32x32xf32> to vector<4x32xf32>
    %cst_16 = arith.constant dense<0.000000e+00> : vector<4x32xf32>
    %31 = tpu.matmul %29, %1, %cst_16 {dimension_numbers = #tpu.dot_dimension_numbers<[1], [0], [0], [1], [0, 0, 1, 1], [], []>} : vector<4x32xf32>, vector<32x32xf32>, vector<4x32xf32> -> vector<4x32xf32>
    %32 = arith.addf %30, %31 : vector<4x32xf32>
    %33 = math.tanh %32 : vector<4x32xf32>
    %34 = vector.extract_strided_slice %8 {offsets = [24, 0], sizes = [4, 32], strides = [1, 1]} : vector<32x32xf32> to vector<4x32xf32>
    %cst_17 = arith.constant dense<0.000000e+00> : vector<4x32xf32>
    %35 = tpu.matmul %33, %1, %cst_17 {dimension_numbers = #tpu.dot_dimension_numbers<[1], [0], [0], [1], [0, 0, 1, 1], [], []>} : vector<4x32xf32>, vector<32x32xf32>, vector<4x32xf32> -> vector<4x32xf32>
    %36 = arith.addf %34, %35 : vector<4x32xf32>
    %37 = math.tanh %36 : vector<4x32xf32>
    %38 = vector.extract_strided_slice %8 {offsets = [28, 0], sizes = [4, 32], strides = [1, 1]} : vector<32x32xf32> to vector<4x32xf32>
    %cst_18 = arith.constant dense<0.000000e+00> : vector<4x32xf32>
    %39 = tpu.matmul %37, %1, %cst_18 {dimension_numbers = #tpu.dot_dimension_numbers<[1], [0], [0], [1], [0, 0, 1, 1], [], []>} : vector<4x32xf32>, vector<32x32xf32>, vector<4x32xf32> -> vector<4x32xf32>
    %40 = arith.addf %38, %39 : vector<4x32xf32>
    %41 = math.tanh %40 : vector<4x32xf32>
    %42 = vector.extract_strided_slice %41 {offsets = [0, 0], sizes = [2, 32], strides = [1, 1]} : vector<4x32xf32> to vector<2x32xf32>
    %43 = vector.extract_strided_slice %41 {offsets = [2, 0], sizes = [2, 32], strides = [1, 1]} : vector<4x32xf32> to vector<2x32xf32>
    %cst_19 = arith.constant dense<0.000000e+00> : vector<2x32xf32>
    %44 = tpu.matmul %42, %3, %cst_19 {dimension_numbers = #tpu.dot_dimension_numbers<[1], [0], [0], [1], [0, 0, 1, 1], [], []>} : vector<2x32xf32>, vector<32x32xf32>, vector<2x32xf32> -> vector<2x32xf32>
    %45 = arith.mulf %44, %43 : vector<2x32xf32>
    %cst_20 = arith.constant dense<0.000000e+00> : vector<2xf32>
    %46 = vector.multi_reduction <add>, %45, %cst_20 [1] : vector<2x32xf32> to vector<2xf32>
    %47 = arith.negf %46 : vector<2xf32>
    %48 = math.exp %47 : vector<2xf32>
    %cst_21 = arith.constant 1.000000e+00 : f32
    %49 = vector.broadcast %cst_21 : f32 to vector<2xf32>
    %50 = arith.addf %49, %48 : vector<2xf32>
    %51 = arith.divf %49, %50 : vector<2xf32>
    %52 = vector.shape_cast %51 : vector<2xf32> to vector<1x2xf32>
    %c0_22 = arith.constant 0 : index
    %c0_23 = arith.constant 0 : index
    %53 = vector.load %arg5[%c0_22, %c0_23] : memref<1x2xf32, #tpu.memory_space<vmem>>, vector<1x2xf32>
    tpu.vector_store %arg5[%c0_22, %c0_23], %52 {strides = array<i32>} : memref<1x2xf32, #tpu.memory_space<vmem>>, vector<1x2xf32>,
    %c0_24 = arith.constant 0 : index
    %c0_25 = arith.constant 0 : index
    %54 = vector.load %arg6[%c0_24, %c0_25] : memref<2x32xf32, #tpu.memory_space<vmem>>, vector<2x32xf32>
    tpu.vector_store %arg6[%c0_24, %c0_25], %43 {strides = array<i32>} : memref<2x32xf32, #tpu.memory_space<vmem>>, vector<2x32xf32>,
    return
  }
}

</mosaic_0001>

<llo_original>
// kernel: dual_encoder_forward.1
$region0: #{dual_encoder_forward.1}
  #allocation0 [shape = 'u32[]', space=smem, size = 0x4, offset = 0x4, fixed_abs, tag = 'smem constant byte address 0x4 - core index']
  #allocation1 [shape = 'u32[144,128]{1,0:T(1,128)}', space=vmem, size = 0x12000, scoped, tag = 'internal scratch']
  %s0 = inlined_call_operand.vmem [shape: f32[8,4,16], index: 0, kind: input, shape index: {}]
  %s1 = inlined_call_operand.vmem [shape: f32[16,32], index: 1, kind: input, shape index: {}]
  %s2 = inlined_call_operand.vmem [shape: f32[32,32], index: 2, kind: input, shape index: {}]
  %s3 = inlined_call_operand.vmem [shape: f32[1,32], index: 3, kind: input, shape index: {}]
  %s4 = inlined_call_operand.vmem [shape: f32[32,32], index: 4, kind: input, shape index: {}]
  %s5 = inlined_call_operand.hbm [shape: f32[1,2], index: 5, kind: output, shape index: {0}]
  %s6 = inlined_call_operand.hbm [shape: f32[2,32], index: 6, kind: output, shape index: {1}]
  %7 = xla_tuple %s5, %s6
  %s8 = sld [smem:[#allocation0]]
  $region38: #{dual_encoder_forward.1} parent=0
    _
  %s10 = ssub.s32 1, %s8
  %s11 = scalar_select 0, %s10, %s8
  $region1: #{dual_encoder_forward.1} parent=0
    #allocation2 [shape = 'u8[512]{0}', space=vmem, size = 0x400, scoped, tag = 'output window, operand 0, single buffered']
    #allocation3 [shape = 's32[1]{0}', space=sflag, size = 0x4, scoped, tag = 'scoped memory for dual_encoder_forward.1']
    #allocation4 [shape = 'u8[1024]{0}', space=vmem, size = 0x400, scoped, tag = 'output window, operand 1, single buffered']
    #allocation5 [shape = 's32[1]{0}', space=sflag, size = 0x4, scoped, tag = 'scoped memory for dual_encoder_forward.1']
    %12 = vsyncpa [#allocation3], 0
    %13 = vsyncpa [#allocation5], 0
    // Predicated region
    $region2: #{dual_encoder_forward.1} parent=1 // pred_check
      _
    $region3: #{dual_encoder_forward.1} parent=1 // pred_check_branch
      %15 = sbr.rel (0) target = $region5
    $region4: #{dual_encoder_forward.1} parent=1 // pred_region
      _
    $region5: #{dual_encoder_forward.1} parent=1 // pred_fallthru
      _
    // Predicated region
    $region6: #{dual_encoder_forward.1} parent=1 // pred_check
      _
    $region7: #{dual_encoder_forward.1} parent=1 // pred_check_branch
      %17 = sbr.rel (0) target = $region9
    $region8: #{dual_encoder_forward.1} parent=1 // pred_region
      _
    $region9: #{dual_encoder_forward.1} parent=1 // pred_fallthru
      _
    // Predicated region
    $region10: #{dual_encoder_forward.1} parent=1 // pred_check
      _
    $region11: #{dual_encoder_forward.1} parent=1 // pred_check_branch
      %19 = sbr.rel (0) target = $region13
    $region12: #{dual_encoder_forward.1} parent=1 // pred_region
      _
    $region13: #{dual_encoder_forward.1} parent=1 // pred_fallthru
      _
    // Predicated region
    $region14: #{dual_encoder_forward.1} parent=1 // pred_check
      _
    $region15: #{dual_encoder_forward.1} parent=1 // pred_check_branch
      %21 = sbr.rel (0) target = $region17
    $region16: #{dual_encoder_forward.1} parent=1 // pred_region
      _
    $region17: #{dual_encoder_forward.1} parent=1 // pred_fallthru
      _
    // Predicated region
    $region18: #{dual_encoder_forward.1} parent=1 // pred_check
      _
    $region19: #{dual_encoder_forward.1} parent=1 // pred_check_branch
      %23 = sbr.rel (0) target = $region21
    $region20: #{dual_encoder_forward.1} parent=1 // pred_region
      _
    $region21: #{dual_encoder_forward.1} parent=1 // pred_fallthru
      _
    %v24 = vld [vmem:[%s1] sm:$0xff]
    %v25 = vld [vmem:[%s1 + $0x8] sm:$0xff]
    %v26 = vld [vmem:[%s2] sm:$0xff]
    %v27 = vld [vmem:[%s2 + $0x8] sm:$0xff]
    %v28 = vld [vmem:[%s2 + $0x10] sm:$0xff]
    %v29 = vld [vmem:[%s2 + $0x18] sm:$0xff]
    %v30 = vld [vmem:[%s3] sm:$0x1]
    %v31 = vld [vmem:[%s4] sm:$0xff]
    %v32 = vld [vmem:[%s4 + $0x8] sm:$0xff]
    %v33 = vld [vmem:[%s4 + $0x10] sm:$0xff]
    %v34 = vld [vmem:[%s4 + $0x18] sm:$0xff]
    %v35 = vld [vmem:[%s0] sm:$0xf]
    %v36 = vld [vmem:[%s0 + $0x4] sm:$0xf]
    %v37 = vld [vmem:[%s0 + $0x8] sm:$0xf]
    %v38 = vld [vmem:[%s0 + $0xc] sm:$0xf]
    %v39 = vld [vmem:[%s0 + $0x10] sm:$0xf]
    %v40 = vld [vmem:[%s0 + $0x14] sm:$0xf]
    %v41 = vld [vmem:[%s0 + $0x18] sm:$0xf]
    %v42 = vld [vmem:[%s0 + $0x1c] sm:$0xf]
    %v44 = vlaneseq
    %v45 = vshrl.u32 %v44, 7
    %v46 = vsub.s32 0, %v45
    %v47 = vrot.slane %v30, %v46
    %v57 = vcombine.low %v35, %v36
    %v58 = vcombine.low %v37, %v38
    %v59 = vcombine.low %v39, %v40
    %v60 = vcombine.low %v41, %v42
    %vm61 = vcmask 130048
    %v62 = vsel %vm61, %v57, 0
    %v64 = vsel %vm61, %v58, 0
    %v66 = vsel %vm61, %v59, 0
    %v68 = vsel %vm61, %v60, 0
    %70 = vmatprep.subr.mxu0 0.0
    %71 = vmatpush1.msra.mxu0 0.0
    %72 = vmatprep.subr.mxu0 0.0
    %73 = vmatpush1.msra.mxu0 0.0
    %74 = vmatprep.subr.mxu0 0.0
    %75 = vmatpush1.msra.mxu0 0.0
    %76 = vmatprep.subr.mxu0 0.0
    %77 = vmatpush1.msra.mxu0 0.0
    %78 = vmatprep.subr.mxu0 0.0
    %79 = vmatpush1.msra.mxu0 0.0
    %80 = vmatprep.subr.mxu0 0.0
    %81 = vmatpush1.msra.mxu0 0.0
    %82 = vmatprep.subr.mxu0 0.0
    %83 = vmatpush1.msra.mxu0 0.0
    %84 = vmatprep.subr.mxu0 0.0
    %85 = vmatpush1.msra.mxu0 0.0
    %86 = vmatprep.subr.mxu0 0.0
    %87 = vmatpush1.msra.mxu0 0.0
    %88 = vmatprep.subr.mxu0 0.0
    %89 = vmatpush1.msra.mxu0 0.0
    %90 = vmatprep.subr.mxu0 0.0
    %91 = vmatpush1.msra.mxu0 0.0
    %92 = vmatprep.subr.mxu0 0.0
    %93 = vmatpush1.msra.mxu0 0.0
    %94 = vmatprep.subr.mxu0 0.0
    %95 = vmatpush1.msra.mxu0 0.0
    %96 = vmatprep.subr.mxu0 0.0
    %97 = vmatpush1.msra.mxu0 0.0
    %98 = vmatprep.subr.mxu0 0.0
    %99 = vmatpush1.msra.mxu0 %v25
    %100 = vmatprep.subr.mxu0 0.0
    %101 = vmatpush1.msra.mxu0 %v24
    %102 = vmatprep.subr.mxu0 0.0
    %103 = vmatpush2.msra.mxu0 0.0
    %104 = vmatprep.subr.mxu0 0.0
    %105 = vmatpush2.msra.mxu0 0.0
    %106 = vmatprep.subr.mxu0 0.0
    %107 = vmatpush2.msra.mxu0 0.0
    %108 = vmatprep.subr.mxu0 0.0
    %109 = vmatpush2.msra.mxu0 0.0
    %110 = vmatprep.subr.mxu0 0.0
    %111 = vmatpush2.msra.mxu0 0.0
    %112 = vmatprep.subr.mxu0 0.0
    %113 = vmatpush2.msra.mxu0 0.0
    %114 = vmatprep.subr.mxu0 0.0
    %115 = vmatpush2.msra.mxu0 0.0
    %116 = vmatprep.subr.mxu0 0.0
    %117 = vmatpush2.msra.mxu0 0.0
    %118 = vmatprep.subr.mxu0 0.0
    %119 = vmatpush2.msra.mxu0 0.0
    %120 = vmatprep.subr.mxu0 0.0
    %121 = vmatpush2.msra.mxu0 0.0
    %122 = vmatprep.subr.mxu0 0.0
    %123 = vmatpush2.msra.mxu0 0.0
    %124 = vmatprep.subr.mxu0 0.0
    %125 = vmatpush2.msra.mxu0 0.0
    %126 = vmatprep.subr.mxu0 0.0
    %127 = vmatpush2.msra.mxu0 0.0
    %128 = vmatprep.subr.mxu0 0.0
    %129 = vmatpush2.msra.mxu0 0.0
    %130 = vmatprep.subr.mxu0 0.0
    %131 = vmatpush2.msra.mxu0 0.0
    %132 = vmatprep.subr.mxu0 0.0
    %133 = vmatpush2.msra.mxu0 0.0
    %134 = vmatprep.mubr.f32.mxu0 0.0
    %135 = vmatmul.mubr.f32.gmra.mxu0 %v62
    %v136 = vpop.f32.mrf.mxu0
    %v137 = vadd.f32 %v47, %v136
    %v138 = vpop.f32.mrf.mxu0
    %139 = vmatprep.mubr.f32.mxu0 0.0
    %140 = vmatmul.mubr.f32.gmra.mxu0 %v64
    %v141 = vpop.f32.mrf.mxu0
    %v142 = vadd.f32 %v47, %v141
    %v143 = vpop.f32.mrf.mxu0
    %144 = vmatprep.mubr.f32.mxu0 0.0
    %145 = vmatmul.mubr.f32.gmra.mxu0 %v66
    %v146 = vpop.f32.mrf.mxu0
    %v147 = vadd.f32 %v47, %v146
    %v148 = vpop.f32.mrf.mxu0
    %149 = vmatprep.mubr.f32.mxu0 0.0
    %150 = vmatmul.mubr.f32.gmra.mxu0 %v68
    %v151 = vpop.f32.mrf.mxu0
    %v152 = vadd.f32 %v47, %v151
    %v153 = vpop.f32.mrf.mxu0
    %154 = vdwg.mxu0
    %vm155 = vcmask 261120
    %v157 = vsel %vm155, 0.0, 0
    %159 = vmatprep.subr.mxu0 0.0
    %160 = vmatpush1.msra.mxu0 0.0
    %161 = vmatprep.subr.mxu0 0.0
    %162 = vmatpush1.msra.mxu0 0.0
    %163 = vmatprep.subr.mxu0 0.0
    %164 = vmatpush1.msra.mxu0 0.0
    %165 = vmatprep.subr.mxu0 0.0
    %166 = vmatpush1.msra.mxu0 0.0
    %167 = vmatprep.subr.mxu0 0.0
    %168 = vmatpush1.msra.mxu0 0.0
    %169 = vmatprep.subr.mxu0 0.0
    %170 = vmatpush1.msra.mxu0 0.0
    %171 = vmatprep.subr.mxu0 0.0
    %172 = vmatpush1.msra.mxu0 0.0
    %173 = vmatprep.subr.mxu0 0.0
    %174 = vmatpush1.msra.mxu0 0.0
    %175 = vmatprep.subr.mxu0 0.0
    %176 = vmatpush1.msra.mxu0 0.0
    %177 = vmatprep.subr.mxu0 0.0
    %178 = vmatpush1.msra.mxu0 0.0
    %179 = vmatprep.subr.mxu0 0.0
    %180 = vmatpush1.msra.mxu0 0.0
    %181 = vmatprep.subr.mxu0 0.0
    %182 = vmatpush1.msra.mxu0 0.0
    %183 = vmatprep.subr.mxu0 0.0
    %184 = vmatpush1.msra.mxu0 %v29
    %185 = vmatprep.subr.mxu0 0.0
    %186 = vmatpush1.msra.mxu0 %v28
    %187 = vmatprep.subr.mxu0 0.0
    %188 = vmatpush1.msra.mxu0 %v27
    %189 = vmatprep.subr.mxu0 0.0
    %190 = vmatpush1.msra.mxu0 %v26
    %191 = vmatprep.subr.mxu0 0.0
    %192 = vmatpush2.msra.mxu0 0.0
    %193 = vmatprep.subr.mxu0 0.0
    %194 = vmatpush2.msra.mxu0 0.0
    %195 = vmatprep.subr.mxu0 0.0
    %196 = vmatpush2.msra.mxu0 0.0
    %197 = vmatprep.subr.mxu0 0.0
    %198 = vmatpush2.msra.mxu0 0.0
    %199 = vmatprep.subr.mxu0 0.0
    %200 = vmatpush2.msra.mxu0 0.0
    %201 = vmatprep.subr.mxu0 0.0
    %202 = vmatpush2.msra.mxu0 0.0
    %203 = vmatprep.subr.mxu0 0.0
    %204 = vmatpush2.msra.mxu0 0.0
    %205 = vmatprep.subr.mxu0 0.0
    %206 = vmatpush2.msra.mxu0 0.0
    %207 = vmatprep.subr.mxu0 0.0
    %208 = vmatpush2.msra.mxu0 0.0
    %209 = vmatprep.subr.mxu0 0.0
    %210 = vmatpush2.msra.mxu0 0.0
    %211 = vmatprep.subr.mxu0 0.0
    %212 = vmatpush2.msra.mxu0 0.0
    %213 = vmatprep.subr.mxu0 0.0
    %214 = vmatpush2.msra.mxu0 0.0
    %215 = vmatprep.subr.mxu0 0.0
    %216 = vmatpush2.msra.mxu0 0.0
    %217 = vmatprep.subr.mxu0 0.0
    %218 = vmatpush2.msra.mxu0 0.0
    %219 = vmatprep.subr.mxu0 0.0
    %220 = vmatpush2.msra.mxu0 0.0
    %221 = vmatprep.subr.mxu0 0.0
    %222 = vmatpush2.msra.mxu0 0.0
    %223 = vmatprep.mubr.f32.mxu0 0.0
    %224 = vmatmul.mubr.f32.gmra.mxu0 %v157
    %v225 = vpop.f32.mrf.mxu0
    %v226 = vadd.f32 0.0, %v225
    %v227 = vpop.f32.mrf.mxu0
    %228 = vdwg.mxu0
    %v229 = vadd.f32 %v137, %v226
    %v230 = vtanh.pop %v229
    %v232 = vsel %vm155, %v230, 0
    %234 = vmatprep.subr.mxu0 0.0
    %235 = vmatpush1.msra.mxu0 0.0
    %236 = vmatprep.subr.mxu0 0.0
    %237 = vmatpush1.msra.mxu0 0.0
    %238 = vmatprep.subr.mxu0 0.0
    %239 = vmatpush1.msra.mxu0 0.0
    %240 = vmatprep.subr.mxu0 0.0
    %241 = vmatpush1.msra.mxu0 0.0
    %242 = vmatprep.subr.mxu0 0.0
    %243 = vmatpush1.msra.mxu0 0.0
    %244 = vmatprep.subr.mxu0 0.0
    %245 = vmatpush1.msra.mxu0 0.0
    %246 = vmatprep.subr.mxu0 0.0
    %247 = vmatpush1.msra.mxu0 0.0
    %248 = vmatprep.subr.mxu0 0.0
    %249 = vmatpush1.msra.mxu0 0.0
    %250 = vmatprep.subr.mxu0 0.0
    %251 = vmatpush1.msra.mxu0 0.0
    %252 = vmatprep.subr.mxu0 0.0
    %253 = vmatpush1.msra.mxu0 0.0
    %254 = vmatprep.subr.mxu0 0.0
    %255 = vmatpush1.msra.mxu0 0.0
    %256 = vmatprep.subr.mxu0 0.0
    %257 = vmatpush1.msra.mxu0 0.0
    %258 = vmatprep.subr.mxu0 0.0
    %259 = vmatpush1.msra.mxu0 %v29
    %260 = vmatprep.subr.mxu0 0.0
    %261 = vmatpush1.msra.mxu0 %v28
    %262 = vmatprep.subr.mxu0 0.0
    %263 = vmatpush1.msra.mxu0 %v27
    %264 = vmatprep.subr.mxu0 0.0
    %265 = vmatpush1.msra.mxu0 %v26
    %266 = vmatprep.subr.mxu0 0.0
    %267 = vmatpush2.msra.mxu0 0.0
    %268 = vmatprep.subr.mxu0 0.0
    %269 = vmatpush2.msra.mxu0 0.0
    %270 = vmatprep.subr.mxu0 0.0
    %271 = vmatpush2.msra.mxu0 0.0
    %272 = vmatprep.subr.mxu0 0.0
    %273 = vmatpush2.msra.mxu0 0.0
    %274 = vmatprep.subr.mxu0 0.0
    %275 = vmatpush2.msra.mxu0 0.0
    %276 = vmatprep.subr.mxu0 0.0
    %277 = vmatpush2.msra.mxu0 0.0
    %278 = vmatprep.subr.mxu0 0.0
    %279 = vmatpush2.msra.mxu0 0.0
    %280 = vmatprep.subr.mxu0 0.0
    %281 = vmatpush2.msra.mxu0 0.0
    %282 = vmatprep.subr.mxu0 0.0
    %283 = vmatpush2.msra.mxu0 0.0
    %284 = vmatprep.subr.mxu0 0.0
    %285 = vmatpush2.msra.mxu0 0.0
    %286 = vmatprep.subr.mxu0 0.0
    %287 = vmatpush2.msra.mxu0 0.0
    %288 = vmatprep.subr.mxu0 0.0
    %289 = vmatpush2.msra.mxu0 0.0
    %290 = vmatprep.subr.mxu0 0.0
    %291 = vmatpush2.msra.mxu0 0.0
    %292 = vmatprep.subr.mxu0 0.0
    %293 = vmatpush2.msra.mxu0 0.0
    %294 = vmatprep.subr.mxu0 0.0
    %295 = vmatpush2.msra.mxu0 0.0
    %296 = vmatprep.subr.mxu0 0.0
    %297 = vmatpush2.msra.mxu0 0.0
    %298 = vmatprep.mubr.f32.mxu0 0.0
    %299 = vmatmul.mubr.f32.gmra.mxu0 %v232
    %v300 = vpop.f32.mrf.mxu0
    %v301 = vadd.f32 0.0, %v300
    %v302 = vpop.f32.mrf.mxu0
    %303 = vdwg.mxu0
    %v305 = vrot.slane %v301, 4
    %v307 = vadd.f32 %v137, %v305
    %v308 = vtanh.pop %v307
    %v310 = vrot.slane %v308, 4
    %v311 = vsel %vm155, %v310, 0
    %313 = vmatprep.subr.mxu0 0.0
    %314 = vmatpush1.msra.mxu0 0.0
    %315 = vmatprep.subr.mxu0 0.0
    %316 = vmatpush1.msra.mxu0 0.0
    %317 = vmatprep.subr.mxu0 0.0
    %318 = vmatpush1.msra.mxu0 0.0
    %319 = vmatprep.subr.mxu0 0.0
    %320 = vmatpush1.msra.mxu0 0.0
    %321 = vmatprep.subr.mxu0 0.0
    %322 = vmatpush1.msra.mxu0 0.0
    %323 = vmatprep.subr.mxu0 0.0
    %324 = vmatpush1.msra.mxu0 0.0
    %325 = vmatprep.subr.mxu0 0.0
    %326 = vmatpush1.msra.mxu0 0.0
    %327 = vmatprep.subr.mxu0 0.0
    %328 = vmatpush1.msra.mxu0 0.0
    %329 = vmatprep.subr.mxu0 0.0
    %330 = vmatpush1.msra.mxu0 0.0
    %331 = vmatprep.subr.mxu0 0.0
    %332 = vmatpush1.msra.mxu0 0.0
    %333 = vmatprep.subr.mxu0 0.0
    %334 = vmatpush1.msra.mxu0 0.0
    %335 = vmatprep.subr.mxu0 0.0
    %336 = vmatpush1.msra.mxu0 0.0
    %337 = vmatprep.subr.mxu0 0.0
    %338 = vmatpush1.msra.mxu0 %v29
    %339 = vmatprep.subr.mxu0 0.0
    %340 = vmatpush1.msra.mxu0 %v28
    %341 = vmatprep.subr.mxu0 0.0
    %342 = vmatpush1.msra.mxu0 %v27
    %343 = vmatprep.subr.mxu0 0.0
    %344 = vmatpush1.msra.mxu0 %v26
    %345 = vmatprep.subr.mxu0 0.0
    %346 = vmatpush2.msra.mxu0 0.0
    %347 = vmatprep.subr.mxu0 0.0
    %348 = vmatpush2.msra.mxu0 0.0
    %349 = vmatprep.subr.mxu0 0.0
    %350 = vmatpush2.msra.mxu0 0.0
    %351 = vmatprep.subr.mxu0 0.0
    %352 = vmatpush2.msra.mxu0 0.0
    %353 = vmatprep.subr.mxu0 0.0
    %354 = vmatpush2.msra.mxu0 0.0
    %355 = vmatprep.subr.mxu0 0.0
    %356 = vmatpush2.msra.mxu0 0.0
    %357 = vmatprep.subr.mxu0 0.0
    %358 = vmatpush2.msra.mxu0 0.0
    %359 = vmatprep.subr.mxu0 0.0
    %360 = vmatpush2.msra.mxu0 0.0
    %361 = vmatprep.subr.mxu0 0.0
    %362 = vmatpush2.msra.mxu0 0.0
    %363 = vmatprep.subr.mxu0 0.0
    %364 = vmatpush2.msra.mxu0 0.0
    %365 = vmatprep.subr.mxu0 0.0
    %366 = vmatpush2.msra.mxu0 0.0
    %367 = vmatprep.subr.mxu0 0.0
    %368 = vmatpush2.msra.mxu0 0.0
    %369 = vmatprep.subr.mxu0 0.0
    %370 = vmatpush2.msra.mxu0 0.0
    %371 = vmatprep.subr.mxu0 0.0
    %372 = vmatpush2.msra.mxu0 0.0
    %373 = vmatprep.subr.mxu0 0.0
    %374 = vmatpush2.msra.mxu0 0.0
    %375 = vmatprep.subr.mxu0 0.0
    %376 = vmatpush2.msra.mxu0 0.0
    %377 = vmatprep.mubr.f32.mxu0 0.0
    %378 = vmatmul.mubr.f32.gmra.mxu0 %v311
    %v379 = vpop.f32.mrf.mxu0
    %v380 = vadd.f32 0.0, %v379
    %v381 = vpop.f32.mrf.mxu0
    %382 = vdwg.mxu0
    %v383 = vadd.f32 %v142, %v380
    %v384 = vtanh.pop %v383
    %v386 = vsel %vm155, %v384, 0
    %388 = vmatprep.subr.mxu0 0.0
    %389 = vmatpush1.msra.mxu0 0.0
    %390 = vmatprep.subr.mxu0 0.0
    %391 = vmatpush1.msra.mxu0 0.0
    %392 = vmatprep.subr.mxu0 0.0
    %393 = vmatpush1.msra.mxu0 0.0
    %394 = vmatprep.subr.mxu0 0.0
    %395 = vmatpush1.msra.mxu0 0.0
    %396 = vmatprep.subr.mxu0 0.0
    %397 = vmatpush1.msra.mxu0 0.0
    %398 = vmatprep.subr.mxu0 0.0
    %399 = vmatpush1.msra.mxu0 0.0
    %400 = vmatprep.subr.mxu0 0.0
    %401 = vmatpush1.msra.mxu0 0.0
    %402 = vmatprep.subr.mxu0 0.0
    %403 = vmatpush1.msra.mxu0 0.0
    %404 = vmatprep.subr.mxu0 0.0
    %405 = vmatpush1.msra.mxu0 0.0
    %406 = vmatprep.subr.mxu0 0.0
    %407 = vmatpush1.msra.mxu0 0.0
    %408 = vmatprep.subr.mxu0 0.0
    %409 = vmatpush1.msra.mxu0 0.0
    %410 = vmatprep.subr.mxu0 0.0
    %411 = vmatpush1.msra.mxu0 0.0
    %412 = vmatprep.subr.mxu0 0.0
    %413 = vmatpush1.msra.mxu0 %v29
    %414 = vmatprep.subr.mxu0 0.0
    %415 = vmatpush1.msra.mxu0 %v28
    %416 = vmatprep.subr.mxu0 0.0
    %417 = vmatpush1.msra.mxu0 %v27
    %418 = vmatprep.subr.mxu0 0.0
    %419 = vmatpush1.msra.mxu0 %v26
    %420 = vmatprep.subr.mxu0 0.0
    %421 = vmatpush2.msra.mxu0 0.0
    %422 = vmatprep.subr.mxu0 0.0
    %423 = vmatpush2.msra.mxu0 0.0
    %424 = vmatprep.subr.mxu0 0.0
    %425 = vmatpush2.msra.mxu0 0.0
    %426 = vmatprep.subr.mxu0 0.0
    %427 = vmatpush2.msra.mxu0 0.0
    %428 = vmatprep.subr.mxu0 0.0
    %429 = vmatpush2.msra.mxu0 0.0
    %430 = vmatprep.subr.mxu0 0.0
    %431 = vmatpush2.msra.mxu0 0.0
    %432 = vmatprep.subr.mxu0 0.0
    %433 = vmatpush2.msra.mxu0 0.0
    %434 = vmatprep.subr.mxu0 0.0
    %435 = vmatpush2.msra.mxu0 0.0
    %436 = vmatprep.subr.mxu0 0.0
    %437 = vmatpush2.msra.mxu0 0.0
    %438 = vmatprep.subr.mxu0 0.0
    %439 = vmatpush2.msra.mxu0 0.0
    %440 = vmatprep.subr.mxu0 0.0
    %441 = vmatpush2.msra.mxu0 0.0
    %442 = vmatprep.subr.mxu0 0.0
    %443 = vmatpush2.msra.mxu0 0.0
    %444 = vmatprep.subr.mxu0 0.0
    %445 = vmatpush2.msra.mxu0 0.0
    %446 = vmatprep.subr.mxu0 0.0
    %447 = vmatpush2.msra.mxu0 0.0
    %448 = vmatprep.subr.mxu0 0.0
    %449 = vmatpush2.msra.mxu0 0.0
    %450 = vmatprep.subr.mxu0 0.0
    %451 = vmatpush2.msra.mxu0 0.0
    %452 = vmatprep.mubr.f32.mxu0 0.0
    %453 = vmatmul.mubr.f32.gmra.mxu0 %v386
    %v454 = vpop.f32.mrf.mxu0
    %v455 = vadd.f32 0.0, %v454
    %v456 = vpop.f32.mrf.mxu0
    %457 = vdwg.mxu0
    %v459 = vrot.slane %v455, 4
    %v461 = vadd.f32 %v142, %v459
    %v462 = vtanh.pop %v461
    %v464 = vrot.slane %v462, 4
    %v465 = vsel %vm155, %v464, 0
    %467 = vmatprep.subr.mxu0 0.0
    %468 = vmatpush1.msra.mxu0 0.0
    %469 = vmatprep.subr.mxu0 0.0
    %470 = vmatpush1.msra.mxu0 0.0
    %471 = vmatprep.subr.mxu0 0.0
    %472 = vmatpush1.msra.mxu0 0.0
    %473 = vmatprep.subr.mxu0 0.0
    %474 = vmatpush1.msra.mxu0 0.0
    %475 = vmatprep.subr.mxu0 0.0
    %476 = vmatpush1.msra.mxu0 0.0
    %477 = vmatprep.subr.mxu0 0.0
    %478 = vmatpush1.msra.mxu0 0.0
    %479 = vmatprep.subr.mxu0 0.0
    %480 = vmatpush1.msra.mxu0 0.0
    %481 = vmatprep.subr.mxu0 0.0
    %482 = vmatpush1.msra.mxu0 0.0
    %483 = vmatprep.subr.mxu0 0.0
    %484 = vmatpush1.msra.mxu0 0.0
    %485 = vmatprep.subr.mxu0 0.0
    %486 = vmatpush1.msra.mxu0 0.0
    %487 = vmatprep.subr.mxu0 0.0
    %488 = vmatpush1.msra.mxu0 0.0
    %489 = vmatprep.subr.mxu0 0.0
    %490 = vmatpush1.msra.mxu0 0.0
    %491 = vmatprep.subr.mxu0 0.0
    %492 = vmatpush1.msra.mxu0 %v29
    %493 = vmatprep.subr.mxu0 0.0
    %494 = vmatpush1.msra.mxu0 %v28
    %495 = vmatprep.subr.mxu0 0.0
    %496 = vmatpush1.msra.mxu0 %v27
    %497 = vmatprep.subr.mxu0 0.0
    %498 = vmatpush1.msra.mxu0 %v26
    %499 = vmatprep.subr.mxu0 0.0
    %500 = vmatpush2.msra.mxu0 0.0
    %501 = vmatprep.subr.mxu0 0.0
    %502 = vmatpush2.msra.mxu0 0.0
    %503 = vmatprep.subr.mxu0 0.0
    %504 = vmatpush2.msra.mxu0 0.0
    %505 = vmatprep.subr.mxu0 0.0
    %506 = vmatpush2.msra.mxu0 0.0
    %507 = vmatprep.subr.mxu0 0.0
    %508 = vmatpush2.msra.mxu0 0.0
    %509 = vmatprep.subr.mxu0 0.0
    %510 = vmatpush2.msra.mxu0 0.0
    %511 = vmatprep.subr.mxu0 0.0
    %512 = vmatpush2.msra.mxu0 0.0
    %513 = vmatprep.subr.mxu0 0.0
    %514 = vmatpush2.msra.mxu0 0.0
    %515 = vmatprep.subr.mxu0 0.0
    %516 = vmatpush2.msra.mxu0 0.0
    %517 = vmatprep.subr.mxu0 0.0
    %518 = vmatpush2.msra.mxu0 0.0
    %519 = vmatprep.subr.mxu0 0.0
    %520 = vmatpush2.msra.mxu0 0.0
    %521 = vmatprep.subr.mxu0 0.0
    %522 = vmatpush2.msra.mxu0 0.0
    %523 = vmatprep.subr.mxu0 0.0
    %524 = vmatpush2.msra.mxu0 0.0
    %525 = vmatprep.subr.mxu0 0.0
    %526 = vmatpush2.msra.mxu0 0.0
    %527 = vmatprep.subr.mxu0 0.0
    %528 = vmatpush2.msra.mxu0 0.0
    %529 = vmatprep.subr.mxu0 0.0
    %530 = vmatpush2.msra.mxu0 0.0
    %531 = vmatprep.mubr.f32.mxu0 0.0
    %532 = vmatmul.mubr.f32.gmra.mxu0 %v465
    %v533 = vpop.f32.mrf.mxu0
    %v534 = vadd.f32 0.0, %v533
    %v535 = vpop.f32.mrf.mxu0
    %536 = vdwg.mxu0
    %v537 = vadd.f32 %v147, %v534
    %v538 = vtanh.pop %v537
    %v540 = vsel %vm155, %v538, 0
    %542 = vmatprep.subr.mxu0 0.0
    %543 = vmatpush1.msra.mxu0 0.0
    %544 = vmatprep.subr.mxu0 0.0
    %545 = vmatpush1.msra.mxu0 0.0
    %546 = vmatprep.subr.mxu0 0.0
    %547 = vmatpush1.msra.mxu0 0.0
    %548 = vmatprep.subr.mxu0 0.0
    %549 = vmatpush1.msra.mxu0 0.0
    %550 = vmatprep.subr.mxu0 0.0
    %551 = vmatpush1.msra.mxu0 0.0
    %552 = vmatprep.subr.mxu0 0.0
    %553 = vmatpush1.msra.mxu0 0.0
    %554 = vmatprep.subr.mxu0 0.0
    %555 = vmatpush1.msra.mxu0 0.0
    %556 = vmatprep.subr.mxu0 0.0
    %557 = vmatpush1.msra.mxu0 0.0
    %558 = vmatprep.subr.mxu0 0.0
    %559 = vmatpush1.msra.mxu0 0.0
    %560 = vmatprep.subr.mxu0 0.0
    %561 = vmatpush1.msra.mxu0 0.0
    %562 = vmatprep.subr.mxu0 0.0
    %563 = vmatpush1.msra.mxu0 0.0
    %564 = vmatprep.subr.mxu0 0.0
    %565 = vmatpush1.msra.mxu0 0.0
    %566 = vmatprep.subr.mxu0 0.0
    %567 = vmatpush1.msra.mxu0 %v29
    %568 = vmatprep.subr.mxu0 0.0
    %569 = vmatpush1.msra.mxu0 %v28
    %570 = vmatprep.subr.mxu0 0.0
    %571 = vmatpush1.msra.mxu0 %v27
    %572 = vmatprep.subr.mxu0 0.0
    %573 = vmatpush1.msra.mxu0 %v26
    %574 = vmatprep.subr.mxu0 0.0
    %575 = vmatpush2.msra.mxu0 0.0
    %576 = vmatprep.subr.mxu0 0.0
    %577 = vmatpush2.msra.mxu0 0.0
    %578 = vmatprep.subr.mxu0 0.0
    %579 = vmatpush2.msra.mxu0 0.0
    %580 = vmatprep.subr.mxu0 0.0
    %581 = vmatpush2.msra.mxu0 0.0
    %582 = vmatprep.subr.mxu0 0.0
    %583 = vmatpush2.msra.mxu0 0.0
    %584 = vmatprep.subr.mxu0 0.0
    %585 = vmatpush2.msra.mxu0 0.0
    %586 = vmatprep.subr.mxu0 0.0
    %587 = vmatpush2.msra.mxu0 0.0
    %588 = vmatprep.subr.mxu0 0.0
    %589 = vmatpush2.msra.mxu0 0.0
    %590 = vmatprep.subr.mxu0 0.0
    %591 = vmatpush2.msra.mxu0 0.0
    %592 = vmatprep.subr.mxu0 0.0
    %593 = vmatpush2.msra.mxu0 0.0
    %594 = vmatprep.subr.mxu0 0.0
    %595 = vmatpush2.msra.mxu0 0.0
    %596 = vmatprep.subr.mxu0 0.0
    %597 = vmatpush2.msra.mxu0 0.0
    %598 = vmatprep.subr.mxu0 0.0
    %599 = vmatpush2.msra.mxu0 0.0
    %600 = vmatprep.subr.mxu0 0.0
    %601 = vmatpush2.msra.mxu0 0.0
    %602 = vmatprep.subr.mxu0 0.0
    %603 = vmatpush2.msra.mxu0 0.0
    %604 = vmatprep.subr.mxu0 0.0
    %605 = vmatpush2.msra.mxu0 0.0
    %606 = vmatprep.mubr.f32.mxu0 0.0
    %607 = vmatmul.mubr.f32.gmra.mxu0 %v540
    %v608 = vpop.f32.mrf.mxu0
    %v609 = vadd.f32 0.0, %v608
    %v610 = vpop.f32.mrf.mxu0
    %611 = vdwg.mxu0
    %v613 = vrot.slane %v609, 4
    %v615 = vadd.f32 %v147, %v613
    %v616 = vtanh.pop %v615
    %v618 = vrot.slane %v616, 4
    %v619 = vsel %vm155, %v618, 0
    %621 = vmatprep.subr.mxu0 0.0
    %622 = vmatpush1.msra.mxu0 0.0
    %623 = vmatprep.subr.mxu0 0.0
    %624 = vmatpush1.msra.mxu0 0.0
    %625 = vmatprep.subr.mxu0 0.0
    %626 = vmatpush1.msra.mxu0 0.0
    %627 = vmatprep.subr.mxu0 0.0
    %628 = vmatpush1.msra.mxu0 0.0
    %629 = vmatprep.subr.mxu0 0.0
    %630 = vmatpush1.msra.mxu0 0.0
    %631 = vmatprep.subr.mxu0 0.0
    %632 = vmatpush1.msra.mxu0 0.0
    %633 = vmatprep.subr.mxu0 0.0
    %634 = vmatpush1.msra.mxu0 0.0
    %635 = vmatprep.subr.mxu0 0.0
    %636 = vmatpush1.msra.mxu0 0.0
    %637 = vmatprep.subr.mxu0 0.0
    %638 = vmatpush1.msra.mxu0 0.0
    %639 = vmatprep.subr.mxu0 0.0
    %640 = vmatpush1.msra.mxu0 0.0
    %641 = vmatprep.subr.mxu0 0.0
    %642 = vmatpush1.msra.mxu0 0.0
    %643 = vmatprep.subr.mxu0 0.0
    %644 = vmatpush1.msra.mxu0 0.0
    %645 = vmatprep.subr.mxu0 0.0
    %646 = vmatpush1.msra.mxu0 %v29
    %647 = vmatprep.subr.mxu0 0.0
    %648 = vmatpush1.msra.mxu0 %v28
    %649 = vmatprep.subr.mxu0 0.0
    %650 = vmatpush1.msra.mxu0 %v27
    %651 = vmatprep.subr.mxu0 0.0
    %652 = vmatpush1.msra.mxu0 %v26
    %653 = vmatprep.subr.mxu0 0.0
    %654 = vmatpush2.msra.mxu0 0.0
    %655 = vmatprep.subr.mxu0 0.0
    %656 = vmatpush2.msra.mxu0 0.0
    %657 = vmatprep.subr.mxu0 0.0
    %658 = vmatpush2.msra.mxu0 0.0
    %659 = vmatprep.subr.mxu0 0.0
    %660 = vmatpush2.msra.mxu0 0.0
    %661 = vmatprep.subr.mxu0 0.0
    %662 = vmatpush2.msra.mxu0 0.0
    %663 = vmatprep.subr.mxu0 0.0
    %664 = vmatpush2.msra.mxu0 0.0
    %665 = vmatprep.subr.mxu0 0.0
    %666 = vmatpush2.msra.mxu0 0.0
    %667 = vmatprep.subr.mxu0 0.0
    %668 = vmatpush2.msra.mxu0 0.0
    %669 = vmatprep.subr.mxu0 0.0
    %670 = vmatpush2.msra.mxu0 0.0
    %671 = vmatprep.subr.mxu0 0.0
    %672 = vmatpush2.msra.mxu0 0.0
    %673 = vmatprep.subr.mxu0 0.0
    %674 = vmatpush2.msra.mxu0 0.0
    %675 = vmatprep.subr.mxu0 0.0
    %676 = vmatpush2.msra.mxu0 0.0
    %677 = vmatprep.subr.mxu0 0.0
    %678 = vmatpush2.msra.mxu0 0.0
    %679 = vmatprep.subr.mxu0 0.0
    %680 = vmatpush2.msra.mxu0 0.0
    %681 = vmatprep.subr.mxu0 0.0
    %682 = vmatpush2.msra.mxu0 0.0
    %683 = vmatprep.subr.mxu0 0.0
    %684 = vmatpush2.msra.mxu0 0.0
    %685 = vmatprep.mubr.f32.mxu0 0.0
    %686 = vmatmul.mubr.f32.gmra.mxu0 %v619
    %v687 = vpop.f32.mrf.mxu0
    %v688 = vadd.f32 0.0, %v687
    %v689 = vpop.f32.mrf.mxu0
    %690 = vdwg.mxu0
    %v691 = vadd.f32 %v152, %v688
    %v692 = vtanh.pop %v691
    %v694 = vsel %vm155, %v692, 0
    %696 = vmatprep.subr.mxu0 0.0
    %697 = vmatpush1.msra.mxu0 0.0
    %698 = vmatprep.subr.mxu0 0.0
    %699 = vmatpush1.msra.mxu0 0.0
    %700 = vmatprep.subr.mxu0 0.0
    %701 = vmatpush1.msra.mxu0 0.0
    %702 = vmatprep.subr.mxu0 0.0
    %703 = vmatpush1.msra.mxu0 0.0
    %704 = vmatprep.subr.mxu0 0.0
    %705 = vmatpush1.msra.mxu0 0.0
    %706 = vmatprep.subr.mxu0 0.0
    %707 = vmatpush1.msra.mxu0 0.0
    %708 = vmatprep.subr.mxu0 0.0
    %709 = vmatpush1.msra.mxu0 0.0
    %710 = vmatprep.subr.mxu0 0.0
    %711 = vmatpush1.msra.mxu0 0.0
    %712 = vmatprep.subr.mxu0 0.0
    %713 = vmatpush1.msra.mxu0 0.0
    %714 = vmatprep.subr.mxu0 0.0
    %715 = vmatpush1.msra.mxu0 0.0
    %716 = vmatprep.subr.mxu0 0.0
    %717 = vmatpush1.msra.mxu0 0.0
    %718 = vmatprep.subr.mxu0 0.0
    %719 = vmatpush1.msra.mxu0 0.0
    %720 = vmatprep.subr.mxu0 0.0
    %721 = vmatpush1.msra.mxu0 %v29
    %722 = vmatprep.subr.mxu0 0.0
    %723 = vmatpush1.msra.mxu0 %v28
    %724 = vmatprep.subr.mxu0 0.0
    %725 = vmatpush1.msra.mxu0 %v27
    %726 = vmatprep.subr.mxu0 0.0
    %727 = vmatpush1.msra.mxu0 %v26
    %728 = vmatprep.subr.mxu0 0.0
    %729 = vmatpush2.msra.mxu0 0.0
    %730 = vmatprep.subr.mxu0 0.0
    %731 = vmatpush2.msra.mxu0 0.0
    %732 = vmatprep.subr.mxu0 0.0
    %733 = vmatpush2.msra.mxu0 0.0
    %734 = vmatprep.subr.mxu0 0.0
    %735 = vmatpush2.msra.mxu0 0.0
    %736 = vmatprep.subr.mxu0 0.0
    %737 = vmatpush2.msra.mxu0 0.0
    %738 = vmatprep.subr.mxu0 0.0
    %739 = vmatpush2.msra.mxu0 0.0
    %740 = vmatprep.subr.mxu0 0.0
    %741 = vmatpush2.msra.mxu0 0.0
    %742 = vmatprep.subr.mxu0 0.0
    %743 = vmatpush2.msra.mxu0 0.0
    %744 = vmatprep.subr.mxu0 0.0
    %745 = vmatpush2.msra.mxu0 0.0
    %746 = vmatprep.subr.mxu0 0.0
    %747 = vmatpush2.msra.mxu0 0.0
    %748 = vmatprep.subr.mxu0 0.0
    %749 = vmatpush2.msra.mxu0 0.0
    %750 = vmatprep.subr.mxu0 0.0
    %751 = vmatpush2.msra.mxu0 0.0
    %752 = vmatprep.subr.mxu0 0.0
    %753 = vmatpush2.msra.mxu0 0.0
    %754 = vmatprep.subr.mxu0 0.0
    %755 = vmatpush2.msra.mxu0 0.0
    %756 = vmatprep.subr.mxu0 0.0
    %757 = vmatpush2.msra.mxu0 0.0
    %758 = vmatprep.subr.mxu0 0.0
    %759 = vmatpush2.msra.mxu0 0.0
    %760 = vmatprep.mubr.f32.mxu0 0.0
    %761 = vmatmul.mubr.f32.gmra.mxu0 %v694
    %v762 = vpop.f32.mrf.mxu0
    %v763 = vadd.f32 0.0, %v762
    %v764 = vpop.f32.mrf.mxu0
    %765 = vdwg.mxu0
    %v767 = vrot.slane %v763, 4
    %v769 = vadd.f32 %v152, %v767
    %v770 = vtanh.pop %v769
    %v772 = vrot.slane %v770, 4
    %v773 = vsel %vm155, %v772, 0
    %775 = vmatprep.subr.mxu0 0.0
    %776 = vmatpush1.msra.mxu0 0.0
    %777 = vmatprep.subr.mxu0 0.0
    %778 = vmatpush1.msra.mxu0 0.0
    %779 = vmatprep.subr.mxu0 0.0
    %780 = vmatpush1.msra.mxu0 0.0
    %781 = vmatprep.subr.mxu0 0.0
    %782 = vmatpush1.msra.mxu0 0.0
    %783 = vmatprep.subr.mxu0 0.0
    %784 = vmatpush1.msra.mxu0 0.0
    %785 = vmatprep.subr.mxu0 0.0
    %786 = vmatpush1.msra.mxu0 0.0
    %787 = vmatprep.subr.mxu0 0.0
    %788 = vmatpush1.msra.mxu0 0.0
    %789 = vmatprep.subr.mxu0 0.0
    %790 = vmatpush1.msra.mxu0 0.0
    %791 = vmatprep.subr.mxu0 0.0
    %792 = vmatpush1.msra.mxu0 0.0
    %793 = vmatprep.subr.mxu0 0.0
    %794 = vmatpush1.msra.mxu0 0.0
    %795 = vmatprep.subr.mxu0 0.0
    %796 = vmatpush1.msra.mxu0 0.0
    %797 = vmatprep.subr.mxu0 0.0
    %798 = vmatpush1.msra.mxu0 0.0
    %799 = vmatprep.subr.mxu0 0.0
    %800 = vmatpush1.msra.mxu0 %v34
    %801 = vmatprep.subr.mxu0 0.0
    %802 = vmatpush1.msra.mxu0 %v33
    %803 = vmatprep.subr.mxu0 0.0
    %804 = vmatpush1.msra.mxu0 %v32
    %805 = vmatprep.subr.mxu0 0.0
    %806 = vmatpush1.msra.mxu0 %v31
    %807 = vmatprep.subr.mxu0 0.0
    %808 = vmatpush2.msra.mxu0 0.0
    %809 = vmatprep.subr.mxu0 0.0
    %810 = vmatpush2.msra.mxu0 0.0
    %811 = vmatprep.subr.mxu0 0.0
    %812 = vmatpush2.msra.mxu0 0.0
    %813 = vmatprep.subr.mxu0 0.0
    %814 = vmatpush2.msra.mxu0 0.0
    %815 = vmatprep.subr.mxu0 0.0
    %816 = vmatpush2.msra.mxu0 0.0
    %817 = vmatprep.subr.mxu0 0.0
    %818 = vmatpush2.msra.mxu0 0.0
    %819 = vmatprep.subr.mxu0 0.0
    %820 = vmatpush2.msra.mxu0 0.0
    %821 = vmatprep.subr.mxu0 0.0
    %822 = vmatpush2.msra.mxu0 0.0
    %823 = vmatprep.subr.mxu0 0.0
    %824 = vmatpush2.msra.mxu0 0.0
    %825 = vmatprep.subr.mxu0 0.0
    %826 = vmatpush2.msra.mxu0 0.0
    %827 = vmatprep.subr.mxu0 0.0
    %828 = vmatpush2.msra.mxu0 0.0
    %829 = vmatprep.subr.mxu0 0.0
    %830 = vmatpush2.msra.mxu0 0.0
    %831 = vmatprep.subr.mxu0 0.0
    %832 = vmatpush2.msra.mxu0 0.0
    %833 = vmatprep.subr.mxu0 0.0
    %834 = vmatpush2.msra.mxu0 0.0
    %835 = vmatprep.subr.mxu0 0.0
    %836 = vmatpush2.msra.mxu0 0.0
    %837 = vmatprep.subr.mxu0 0.0
    %838 = vmatpush2.msra.mxu0 0.0
    %839 = vmatprep.mubr.f32.mxu0 0.0
    %840 = vmatmul.mubr.f32.gmra.mxu0 %v773
    %v841 = vpop.f32.mrf.mxu0
    %v842 = vadd.f32 0.0, %v841
    %v843 = vpop.f32.mrf.mxu0
    %844 = vdwg.mxu0
    %v845 = vrot.slane %v770, 6
    %v847 = vmul.f32 %v842, %v845
    %vm848 = vcmask 254976
    %v849 = vsel %vm848, %v847, 0.0
    %850 = vadd.xlane.f32.xlu0 %v849
    %v851 = vpop.xlane.xlu0 %850
    %v852 = vxor.u32 %v851, 2147483648
    %v853 = vmul.f32 %v852, 1.442695
    %v854 = vpow.pop %v853
    %v855 = vadd.f32 %v854, 1.0
    %v856 = vrcp.pop %v855
    %v857 = vmul.f32 1.0, %v856
    %v859 = vlaneseq
    %v860 = vand.u32 %v859, 127
    %v861 = vlaneseq
    %v862 = vshrl.u32 %v861, 7
    %v863 = vsub.s32 %v860, %v862
    %v864 = vrot.slane %v857, %v863
    %vm866 = vcmask 8192
    %867 = vst.msk [vmem:[#allocation2] sm:$0x1] %vm866, %v864
    %vm868 = vcmask 261126
    %869 = vst.msk [vmem:[#allocation4 - $0x6] sm:$0xc0] %vm868, %v770
    // Predicated region
    $region22: #{dual_encoder_forward.1} parent=1 // pred_check
      _
    $region23: #{dual_encoder_forward.1} parent=1 // pred_check_branch
      %871 = sbr.rel (0) target = $region25
    $region24: #{dual_encoder_forward.1} parent=1 // pred_region
      %s873 = ssub.s32 16, 16
      %874 = vsyncadd [#allocation3], %s873
      %s876 = sshll.u32 [#allocation2], 4
      %s877 = int_to_ptr.vmem [resolvable:$true] %s876
      %879 = dma.vmem_to_hbm [thread:$0]  %s877, 16, %s5, [#allocation3]
    $region25: #{dual_encoder_forward.1} parent=1 // pred_fallthru
      _
    // Predicated region
    $region26: #{dual_encoder_forward.1} parent=1 // pred_check
      _
    $region27: #{dual_encoder_forward.1} parent=1 // pred_check_branch
      %881 = sbr.rel (0) target = $region29
    $region28: #{dual_encoder_forward.1} parent=1 // pred_region
      %s883 = ssub.s32 32, 32
      %884 = vsyncadd [#allocation5], %s883
      %s886 = sshll.u32 [#allocation4], 4
      %s887 = int_to_ptr.vmem [resolvable:$true] %s886
      %889 = dma.vmem_to_hbm [thread:$0]  %s887, 32, %s6, [#allocation5]
    $region29: #{dual_encoder_forward.1} parent=1 // pred_fallthru
      _
    // Predicated region
    $region30: #{dual_encoder_forward.1} parent=1 // pred_check
      _
    $region31: #{dual_encoder_forward.1} parent=1 // pred_check_branch
      %891 = sbr.rel (0) target = $region33
    $region32: #{dual_encoder_forward.1} parent=1 // pred_region
      %892 = dma.done [#allocation3], 16
    $region33: #{dual_encoder_forward.1} parent=1 // pred_fallthru
      _
    // Predicated region
    $region34: #{dual_encoder_forward.1} parent=1 // pred_check
      _
    $region35: #{dual_encoder_forward.1} parent=1 // pred_check_branch
      %894 = sbr.rel (0) target = $region37
    $region36: #{dual_encoder_forward.1} parent=1 // pred_region
      %895 = dma.done [#allocation5], 32
    $region37: #{dual_encoder_forward.1} parent=1 // pred_fallthru
      _
    %896 = vsyncpa [#allocation3], 1
    %897 = vsyncpa [#allocation5], 1

</llo_original>
